<compile_context>
chip_gen: v5e
topology: v5e:2x2
jax: 0.10.0
libtpu: 0.0.40
codegen_flags: <defaults>
</compile_context>

<pallas_src>
import jax
import jax.numpy as jnp
from jax.experimental import pallas as pl
from jax.experimental.pallas import tpu as pltpu


def _vmem_capacity_bytes():
    """Physical VMEM per TensorCore; falls back to 128 MiB (v5e/v6e)."""
    try:
        return int(pltpu.get_tpu_info().vmem_capacity_bytes)
    except Exception:
        return 128 * 1024 * 1024


def _largest_divisor_leq(x, cap):
    """Largest divisor of x that is <= cap (always >= 1)."""
    cap = max(1, min(x, cap))
    best = 1
    i = 1
    while i * i <= x:
        if x % i == 0:
            for d in (i, x // i):
                if best < d <= cap:
                    best = d
        i += 1
    return best


def _pick_tiles(c, m, hw, budget_elems):
    """Choose (TC, THW): lane-aligned blocks of ~budget_elems (f32) per input."""
    if hw % 128 == 0:
        # Largest 128-multiple divisor of H*W such that m*thw fits the budget.
        k_cap = max(1, budget_elems // (128 * m))
        k = _largest_divisor_leq(hw // 128, k_cap)
        thw = 128 * k
    else:
        # Mosaic layout: a non-full minor block dim must be 128-divisible, so
        # keep the full H*W extent.
        # TODO(synk): for very large non-128-aligned H*W, add a 5-D split-H
        # path (block (1, tc, m, th, W)) to keep blocks within the VMEM budget.
        thw = hw
    tc_cap = max(1, budget_elems // max(1, m * thw))
    tc = _largest_divisor_leq(c, tc_cap)
    return tc, thw


def _make_sums_kernel(thw, lane_w):
    """Build the per-(n, m) streaming-sum kernel for a given lane tiling."""
    n_chunks = thw // lane_w

    def fold_lanes(a):  # (m, thw) -> (m, lane_w): pure VPU vreg adds.
        if n_chunks == 1:
            return a
        acc = a[:, 0:lane_w]
        for j in range(1, n_chunks):
            acc = acc + a[:, j * lane_w:(j + 1) * lane_w]
        return acc

    def kernel(r_ref, l_ref, inter_ref, rsum_ref, lsum_ref,
               inter_sc, rsum_sc, lsum_sc):
        ci, hi = pl.program_id(2), pl.program_id(3)
        first = jnp.logical_and(ci == 0, hi == 0)
        last = jnp.logical_and(ci == pl.num_programs(2) - 1,
                               hi == pl.num_programs(3) - 1)

        @pl.when(first)
        def _():
            inter_sc[...] = jnp.zeros_like(inter_sc)
            rsum_sc[...] = jnp.zeros_like(rsum_sc)
            lsum_sc[...] = jnp.zeros_like(lsum_sc)

        x = r_ref[...].astype(jnp.float32)      # (1, tc, m, thw)
        lab = l_ref[...].astype(jnp.float32)
        # EUP-slot sigmoid: 0.5*tanh(0.5*x)+0.5 (no full-precision VPU divide).
        p = 0.5 * jnp.tanh(0.5 * x) + 0.5

        # Fold the (unit-batch, channel-tile) axes: VPU adds over major dims.
        prod = jnp.sum(p * lab, axis=(0, 1))    # (m, thw)
        psum = jnp.sum(p, axis=(0, 1))
        labsum = jnp.sum(lab, axis=(0, 1))

        # Lane-dense f32 accumulation in VMEM scratch; the cross-lane (XLU)
        # reduce and the narrow (m, 1) store are deferred to the last step.
        inter_sc[...] += fold_lanes(prod)
        rsum_sc[...] += fold_lanes(psum)
        lsum_sc[...] += fold_lanes(labsum)

        @pl.when(last)
        def _():
            inter_ref[...] = jnp.sum(inter_sc[...], axis=1,
                                     keepdims=True).reshape(inter_ref.shape)
            rsum_ref[...] = jnp.sum(rsum_sc[...], axis=1,
                                    keepdims=True).reshape(rsum_ref.shape)
            lsum_ref[...] = jnp.sum(lsum_sc[...], axis=1,
                                    keepdims=True).reshape(lsum_ref.shape)

    return kernel


def g_dice_loss(result, label):
    """Pallas implementation of G_Diceloss.forward for (N, C, M, H, W) inputs.

    `result` / `label` may be f32, bf16 or integer masks; they are widened to
    f32 inside the kernel (narrower dtypes cut the HBM traffic, the roofline).
    """
    n, c, m, h, w = result.shape
    hw = h * w

    # Free reshapes: (N, C, M, H, W) -> (N, C, M, H*W).  No transpose / copy.
    rr = result.reshape(n, c, m, hw)
    ll = label.reshape(n, c, m, hw)

    vmem_cap = _vmem_capacity_bytes()
    small_vmem = vmem_cap <= 80 * 1024 * 1024        # v7x: 64 MiB per TC
    budget_bytes = (4 << 20) if small_vmem else (8 << 20)
    tc, thw = _pick_tiles(c, m, hw, budget_bytes // 4)

    # Dual-TC (v7x) megacore: with a single batch, expose a 2-way split of the
    # reduction work (partial sums are added in the epilogue).
    if n == 1 and (c // tc) % 2 != 0 and (hw // thw) % 2 != 0:
        if hw % 128 == 0 and (thw // 128) % 2 == 0:
            thw //= 2
        elif tc % 2 == 0:
            tc //= 2

    nc_blk = c // tc
    nhw_blk = hw // thw
    split = 1
    split_axis = None
    if n == 1:
        if nhw_blk % 2 == 0:
            split, split_axis, nhw_blk = 2, 3, nhw_blk // 2
        elif nc_blk % 2 == 0:
            split, split_axis, nc_blk = 2, 2, nc_blk // 2

    grid = (split, n, nc_blk, nhw_blk)

    if split_axis == 3:
        in_map = lambda s, ni, ci, hi: (ni, ci, 0, s * nhw_blk + hi)
    elif split_axis == 2:
        in_map = lambda s, ni, ci, hi: (ni, s * nc_blk + ci, 0, hi)
    else:
        in_map = lambda s, ni, ci, hi: (ni, ci, 0, hi)
    out_map = lambda s, ni, ci, hi: (s, ni, 0, 0)

    in_spec = pl.BlockSpec((1, tc, m, thw), in_map)
    out_spec = pl.BlockSpec((1, 1, m, 1), out_map)
    out_sd = jax.ShapeDtypeStruct((split, n, m, 1), jnp.float32)

    lane_w = 128 if thw % 128 == 0 else thw

    # Size the scoped VMEM to the double-buffered working set (2 inputs x 2
    # buffers), capped at 3/4 of physical VMEM (v7x only has 64 MiB per TC).
    itemsize = max(result.dtype.itemsize, label.dtype.itemsize)
    block_bytes = tc * m * thw * itemsize
    base_limit = (40 << 20) if small_vmem else (64 << 20)
    needed = 2 * 2 * block_bytes + (4 << 20)
    vmem_limit = int(min(max(base_limit, needed), vmem_cap * 3 // 4))

    elems = n * c * m * hw
    cost = pl.CostEstimate(
        flops=8 * elems,
        transcendentals=elems,  # one tanh per element (sigmoid)
        bytes_accessed=(rr.size * rr.dtype.itemsize
                        + ll.size * ll.dtype.itemsize
                        + 3 * split * n * m * 4),
    )

    inter, rsum, lsum = pl.pallas_call(
        _make_sums_kernel(thw, lane_w),
        out_shape=(out_sd, out_sd, out_sd),
        grid_spec=pltpu.PrefetchScalarGridSpec(
            num_scalar_prefetch=0,
            grid=grid,
            in_specs=[in_spec, in_spec],
            out_specs=(out_spec, out_spec, out_spec),
            scratch_shapes=[pltpu.VMEM((m, lane_w), jnp.float32)] * 3,
        ),
        compiler_params=pltpu.CompilerParams(
            dimension_semantics=("parallel", "parallel", "arbitrary", "arbitrary"),
            vmem_limit_bytes=vmem_limit,
        ),
        cost_estimate=cost,
    )(rr, ll)

    # Sum the (possibly 2-way) partials and drop the trailing unit dim.
    inter = jnp.sum(inter, axis=0)[:, :, 0]          # (N, M)
    rsum = jnp.sum(rsum, axis=0)[:, :, 0]
    lsum = jnp.sum(lsum, axis=0)[:, :, 0]

    union = rsum + lsum        # sum(p) + sum(label) == sum(p + label)
    weight = 1.0 / (lsum + 1.0)

    # Tiny O(N*M) epilogue, matching the PyTorch expression exactly.
    num = jnp.sum(inter * weight, axis=1)            # (N,)
    den = m * jnp.sum(union * weight, axis=1)        # (N,)
    score = 1.0 - jnp.sum(num / den)
    # TODO(synk): reference's `tmp = weight.cpu().detach_().numpy()` is an
    # unused host-side side effect; intentionally skipped.
    return score


def _g_dice_ref(result, label):
    """Pure-JAX mirror of the PyTorch G_Diceloss.forward."""
    p = jax.nn.sigmoid(result)
    m = result.shape[2]
    intersection = (p * label).sum(axis=(1, 3, 4))
    union = (p + label).sum(axis=(1, 3, 4))
    weight = 1.0 / (label.sum(axis=(1, 3, 4)) + 1.0)
    return 1.0 - ((intersection * weight).sum(1)
                  / (m * (union * weight).sum(1))).sum()


if __name__ == "__main__":
    key = jax.random.PRNGKey(0)
    k1, k2 = jax.random.split(key)

    # (N, C, M, H, W): batch=2, channels=4, M=8 slices, spatial 16x16.
    shape = (2, 4, 8, 16, 16)
    result = jax.random.normal(k1, shape, dtype=jnp.float32)
    label = (jax.random.uniform(k2, shape) > 0.5).astype(jnp.float32)

    out = g_dice_loss(result, label)
    jax.block_until_ready(out)

    ref = _g_dice_ref(result, label)
    assert jnp.allclose(out, ref, rtol=1e-5, atol=1e-5), (out, ref)

    print("KERNEL_OK")
</pallas_src>

<mosaic_0001>
module attributes {stable_mosaic.version = 11 : i64} {
  func.func @kernel(%arg0: i32, %arg1: i32, %arg2: i32, %arg3: i32, %arg4: memref<1x4x8x256xf32, #tpu.memory_space<vmem>>, %arg5: memref<1x4x8x256xf32, #tpu.memory_space<vmem>>, %arg6: memref<1x1x8x1xf32, #tpu.memory_space<vmem>>, %arg7: memref<1x1x8x1xf32, #tpu.memory_space<vmem>>, %arg8: memref<1x1x8x1xf32, #tpu.memory_space<vmem>>, %arg9: memref<8x128xf32, #tpu.memory_space<vmem>>, %arg10: memref<8x128xf32, #tpu.memory_space<vmem>>, %arg11: memref<8x128xf32, #tpu.memory_space<vmem>>) attributes {dimension_semantics = [#tpu.dimension_semantics<parallel>, #tpu.dimension_semantics<parallel>, #tpu.dimension_semantics<arbitrary>, #tpu.dimension_semantics<arbitrary>], iteration_bounds = array<i64: 1, 2, 1, 1>, scalar_prefetch = 0 : i64, scratch_operands = 3 : i64, tpu.core_type = #tpu.core_type<tc>, window_params = [{transform_indices = @transform_0, window_bounds = array<i64: 1, 4, 8, 256>}, {transform_indices = @transform_1, window_bounds = array<i64: 1, 4, 8, 256>}, {transform_indices = @transform_2, window_bounds = array<i64: 1, 1, 8, 1>}, {transform_indices = @transform_3, window_bounds = array<i64: 1, 1, 8, 1>}, {transform_indices = @transform_4, window_bounds = array<i64: 1, 1, 8, 1>}]} {
    %c0_i32 = arith.constant 0 : i32
    %0 = arith.cmpi eq, %arg2, %c0_i32 : i32
    %c0_i32_0 = arith.constant 0 : i32
    %1 = arith.cmpi eq, %arg3, %c0_i32_0 : i32
    %2 = arith.andi %0, %1 : i1
    %c0_i32_1 = arith.constant 0 : i32
    %3 = arith.cmpi eq, %arg2, %c0_i32_1 : i32
    %c0_i32_2 = arith.constant 0 : i32
    %4 = arith.cmpi eq, %arg3, %c0_i32_2 : i32
    %5 = arith.andi %3, %4 : i1
    %6 = arith.extui %2 : i1 to i32
    %c0_i32_3 = arith.constant 0 : i32
    %7 = arith.cmpi ne, %6, %c0_i32_3 : i32
    scf.if %7 {
      %cst_29 = arith.constant 0.000000e+00 : f32
      %41 = vector.broadcast %cst_29 : f32 to vector<8x128xf32>
      %c0_30 = arith.constant 0 : index
      %c0_31 = arith.constant 0 : index
      %42 = vector.load %arg9[%c0_30, %c0_31] : memref<8x128xf32, #tpu.memory_space<vmem>>, vector<8x128xf32>
      tpu.vector_store %arg9[%c0_30, %c0_31], %41 {strides = array<i32>} : memref<8x128xf32, #tpu.memory_space<vmem>>, vector<8x128xf32>,
      %cst_32 = arith.constant 0.000000e+00 : f32
      %43 = vector.broadcast %cst_32 : f32 to vector<8x128xf32>
      %c0_33 = arith.constant 0 : index
      %c0_34 = arith.constant 0 : index
      %44 = vector.load %arg10[%c0_33, %c0_34] : memref<8x128xf32, #tpu.memory_space<vmem>>, vector<8x128xf32>
      tpu.vector_store %arg10[%c0_33, %c0_34], %43 {strides = array<i32>} : memref<8x128xf32, #tpu.memory_space<vmem>>, vector<8x128xf32>,
      %cst_35 = arith.constant 0.000000e+00 : f32
      %45 = vector.broadcast %cst_35 : f32 to vector<8x128xf32>
      %c0_36 = arith.constant 0 : index
      %c0_37 = arith.constant 0 : index
      %46 = vector.load %arg11[%c0_36, %c0_37] : memref<8x128xf32, #tpu.memory_space<vmem>>, vector<8x128xf32>
      tpu.vector_store %arg11[%c0_36, %c0_37], %45 {strides = array<i32>} : memref<8x128xf32, #tpu.memory_space<vmem>>, vector<8x128xf32>,
    } else {
    }
    %c0 = arith.constant 0 : index
    %c0_4 = arith.constant 0 : index
    %c0_5 = arith.constant 0 : index
    %c0_6 = arith.constant 0 : index
    %8 = vector.load %arg4[%c0, %c0_4, %c0_5, %c0_6] : memref<1x4x8x256xf32, #tpu.memory_space<vmem>>, vector<1x4x8x256xf32>
    %c0_7 = arith.constant 0 : index
    %c0_8 = arith.constant 0 : index
    %c0_9 = arith.constant 0 : index
    %c0_10 = arith.constant 0 : index
    %9 = vector.load %arg5[%c0_7, %c0_8, %c0_9, %c0_10] : memref<1x4x8x256xf32, #tpu.memory_space<vmem>>, vector<1x4x8x256xf32>
    %cst = arith.constant 5.000000e-01 : f32
    %10 = vector.broadcast %cst : f32 to vector<1x4x8x256xf32>
    %11 = arith.mulf %10, %8 : vector<1x4x8x256xf32>
    %12 = math.tanh %11 : vector<1x4x8x256xf32>
    %cst_11 = arith.constant 5.000000e-01 : f32
    %13 = vector.broadcast %cst_11 : f32 to vector<1x4x8x256xf32>
    %14 = arith.mulf %13, %12 : vector<1x4x8x256xf32>
    %cst_12 = arith.constant 5.000000e-01 : f32
    %15 = vector.broadcast %cst_12 : f32 to vector<1x4x8x256xf32>
    %16 = arith.addf %14, %15 : vector<1x4x8x256xf32>
    %17 = arith.mulf %16, %9 : vector<1x4x8x256xf32>
    %cst_13 = arith.constant dense<0.000000e+00> : vector<8x256xf32>
    %18 = vector.multi_reduction <add>, %17, %cst_13 [0, 1] : vector<1x4x8x256xf32> to vector<8x256xf32>
    %cst_14 = arith.constant dense<0.000000e+00> : vector<8x256xf32>
    %19 = vector.multi_reduction <add>, %16, %cst_14 [0, 1] : vector<1x4x8x256xf32> to vector<8x256xf32>
    %cst_15 = arith.constant dense<0.000000e+00> : vector<8x256xf32>
    %20 = vector.multi_reduction <add>, %9, %cst_15 [0, 1] : vector<1x4x8x256xf32> to vector<8x256xf32>
    %c0_16 = arith.constant 0 : index
    %c0_17 = arith.constant 0 : index
    %21 = vector.load %arg9[%c0_16, %c0_17] : memref<8x128xf32, #tpu.memory_space<vmem>>, vector<8x128xf32>
    %22 = vector.extract_strided_slice %18 {offsets = [0, 0], sizes = [8, 128], strides = [1, 1]} : vector<8x256xf32> to vector<8x128xf32>
    %23 = vector.extract_strided_slice %18 {offsets = [0, 128], sizes = [8, 128], strides = [1, 1]} : vector<8x256xf32> to vector<8x128xf32>
    %24 = arith.addf %22, %23 : vector<8x128xf32>
    %25 = arith.addf %21, %24 : vector<8x128xf32>
    %c0_18 = arith.constant 0 : index
    %c0_19 = arith.constant 0 : index
    %26 = vector.load %arg9[%c0_18, %c0_19] : memref<8x128xf32, #tpu.memory_space<vmem>>, vector<8x128xf32>
    tpu.vector_store %arg9[%c0_18, %c0_19], %25 {strides = array<i32>} : memref<8x128xf32, #tpu.memory_space<vmem>>, vector<8x128xf32>,
    %c0_20 = arith.constant 0 : index
    %c0_21 = arith.constant 0 : index
    %27 = vector.load %arg10[%c0_20, %c0_21] : memref<8x128xf32, #tpu.memory_space<vmem>>, vector<8x128xf32>
    %28 = vector.extract_strided_slice %19 {offsets = [0, 0], sizes = [8, 128], strides = [1, 1]} : vector<8x256xf32> to vector<8x128xf32>
    %29 = vector.extract_strided_slice %19 {offsets = [0, 128], sizes = [8, 128], strides = [1, 1]} : vector<8x256xf32> to vector<8x128xf32>
    %30 = arith.addf %28, %29 : vector<8x128xf32>
    %31 = arith.addf %27, %30 : vector<8x128xf32>
    %c0_22 = arith.constant 0 : index
    %c0_23 = arith.constant 0 : index
    %32 = vector.load %arg10[%c0_22, %c0_23] : memref<8x128xf32, #tpu.memory_space<vmem>>, vector<8x128xf32>
    tpu.vector_store %arg10[%c0_22, %c0_23], %31 {strides = array<i32>} : memref<8x128xf32, #tpu.memory_space<vmem>>, vector<8x128xf32>,
    %c0_24 = arith.constant 0 : index
    %c0_25 = arith.constant 0 : index
    %33 = vector.load %arg11[%c0_24, %c0_25] : memref<8x128xf32, #tpu.memory_space<vmem>>, vector<8x128xf32>
    %34 = vector.extract_strided_slice %20 {offsets = [0, 0], sizes = [8, 128], strides = [1, 1]} : vector<8x256xf32> to vector<8x128xf32>
    %35 = vector.extract_strided_slice %20 {offsets = [0, 128], sizes = [8, 128], strides = [1, 1]} : vector<8x256xf32> to vector<8x128xf32>
    %36 = arith.addf %34, %35 : vector<8x128xf32>
    %37 = arith.addf %33, %36 : vector<8x128xf32>
    %c0_26 = arith.constant 0 : index
    %c0_27 = arith.constant 0 : index
    %38 = vector.load %arg11[%c0_26, %c0_27] : memref<8x128xf32, #tpu.memory_space<vmem>>, vector<8x128xf32>
    tpu.vector_store %arg11[%c0_26, %c0_27], %37 {strides = array<i32>} : memref<8x128xf32, #tpu.memory_space<vmem>>, vector<8x128xf32>,
    %39 = arith.extui %5 : i1 to i32
    %c0_i32_28 = arith.constant 0 : i32
    %40 = arith.cmpi ne, %39, %c0_i32_28 : i32
    scf.if %40 {
      %c0_29 = arith.constant 0 : index
      %c0_30 = arith.constant 0 : index
      %41 = vector.load %arg9[%c0_29, %c0_30] : memref<8x128xf32, #tpu.memory_space<vmem>>, vector<8x128xf32>
      %cst_31 = arith.constant dense<0.000000e+00> : vector<8xf32>
      %42 = vector.multi_reduction <add>, %41, %cst_31 [1] : vector<8x128xf32> to vector<8xf32>
      %43 = vector.shape_cast %42 : vector<8xf32> to vector<8x1xf32>
      %44 = vector.shape_cast %43 : vector<8x1xf32> to vector<1x1x8x1xf32>
      %c0_32 = arith.constant 0 : index
      %c0_33 = arith.constant 0 : index
      %c0_34 = arith.constant 0 : index
      %c0_35 = arith.constant 0 : index
      %45 = vector.load %arg6[%c0_32, %c0_33, %c0_34, %c0_35] : memref<1x1x8x1xf32, #tpu.memory_space<vmem>>, vector<1x1x8x1xf32>
      tpu.vector_store %arg6[%c0_32, %c0_33, %c0_34, %c0_35], %44 {strides = array<i32>} : memref<1x1x8x1xf32, #tpu.memory_space<vmem>>, vector<1x1x8x1xf32>,
      %c0_36 = arith.constant 0 : index
      %c0_37 = arith.constant 0 : index
      %46 = vector.load %arg10[%c0_36, %c0_37] : memref<8x128xf32, #tpu.memory_space<vmem>>, vector<8x128xf32>
      %cst_38 = arith.constant dense<0.000000e+00> : vector<8xf32>
      %47 = vector.multi_reduction <add>, %46, %cst_38 [1] : vector<8x128xf32> to vector<8xf32>
      %48 = vector.shape_cast %47 : vector<8xf32> to vector<8x1xf32>
      %49 = vector.shape_cast %48 : vector<8x1xf32> to vector<1x1x8x1xf32>
      %c0_39 = arith.constant 0 : index
      %c0_40 = arith.constant 0 : index
      %c0_41 = arith.constant 0 : index
      %c0_42 = arith.constant 0 : index
      %50 = vector.load %arg7[%c0_39, %c0_40, %c0_41, %c0_42] : memref<1x1x8x1xf32, #tpu.memory_space<vmem>>, vector<1x1x8x1xf32>
      tpu.vector_store %arg7[%c0_39, %c0_40, %c0_41, %c0_42], %49 {strides = array<i32>} : memref<1x1x8x1xf32, #tpu.memory_space<vmem>>, vector<1x1x8x1xf32>,
      %c0_43 = arith.constant 0 : index
      %c0_44 = arith.constant 0 : index
      %51 = vector.load %arg11[%c0_43, %c0_44] : memref<8x128xf32, #tpu.memory_space<vmem>>, vector<8x128xf32>
      %cst_45 = arith.constant dense<0.000000e+00> : vector<8xf32>
      %52 = vector.multi_reduction <add>, %51, %cst_45 [1] : vector<8x128xf32> to vector<8xf32>
      %53 = vector.shape_cast %52 : vector<8xf32> to vector<8x1xf32>
      %54 = vector.shape_cast %53 : vector<8x1xf32> to vector<1x1x8x1xf32>
      %c0_46 = arith.constant 0 : index
      %c0_47 = arith.constant 0 : index
      %c0_48 = arith.constant 0 : index
      %c0_49 = arith.constant 0 : index
      %55 = vector.load %arg8[%c0_46, %c0_47, %c0_48, %c0_49] : memref<1x1x8x1xf32, #tpu.memory_space<vmem>>, vector<1x1x8x1xf32>
      tpu.vector_store %arg8[%c0_46, %c0_47, %c0_48, %c0_49], %54 {strides = array<i32>} : memref<1x1x8x1xf32, #tpu.memory_space<vmem>>, vector<1x1x8x1xf32>,
    } else {
    }
    return
  }
  func.func @transform_0(%arg0: i32, %arg1: i32, %arg2: i32, %arg3: i32) -> (i32, i32, i32, i32) {
    %c0_i32 = arith.constant 0 : i32
    %c0_i32_0 = arith.constant 0 : i32
    return %arg1, %arg2, %c0_i32, %arg3 : i32, i32, i32, i32
  }
  func.func @transform_1(%arg0: i32, %arg1: i32, %arg2: i32, %arg3: i32) -> (i32, i32, i32, i32) {
    %c0_i32 = arith.constant 0 : i32
    %c0_i32_0 = arith.constant 0 : i32
    return %arg1, %arg2, %c0_i32, %arg3 : i32, i32, i32, i32
  }
  func.func @transform_2(%arg0: i32, %arg1: i32, %arg2: i32, %arg3: i32) -> (i32, i32, i32, i32) {
    %c0_i32 = arith.constant 0 : i32
    %c0_i32_0 = arith.constant 0 : i32
    %c0_i32_1 = arith.constant 0 : i32
    return %arg0, %arg1, %c0_i32, %c0_i32_0 : i32, i32, i32, i32
  }
  func.func @transform_3(%arg0: i32, %arg1: i32, %arg2: i32, %arg3: i32) -> (i32, i32, i32, i32) {
    %c0_i32 = arith.constant 0 : i32
    %c0_i32_0 = arith.constant 0 : i32
    %c0_i32_1 = arith.constant 0 : i32
    return %arg0, %arg1, %c0_i32, %c0_i32_0 : i32, i32, i32, i32
  }
  func.func @transform_4(%arg0: i32, %arg1: i32, %arg2: i32, %arg3: i32) -> (i32, i32, i32, i32) {
    %c0_i32 = arith.constant 0 : i32
    %c0_i32_0 = arith.constant 0 : i32
    %c0_i32_1 = arith.constant 0 : i32
    return %arg0, %arg1, %c0_i32, %c0_i32_0 : i32, i32, i32, i32
  }
}

</mosaic_0001>

<llo_original>
// kernel: tpu_custom_call.1
$region0: #{tpu_custom_call.1}
  #allocation0 [shape = 'u32[]', space=smem, size = 0x4, offset = 0x4, fixed_abs, tag = 'smem constant byte address 0x4 - core index']
  #allocation1 [shape = 'u32[72,128]{1,0:T(1,128)}', space=vmem, size = 0x9000, scoped, tag = 'internal scratch']
  #allocation2 [shape = 'f32[8,128]{1,0:T(8,128)}', space=vmem, size = 0x1000, scoped, tag = 'scratch operand']
  #allocation3 [shape = 'f32[8,128]{1,0:T(8,128)}', space=vmem, size = 0x1000, scoped, tag = 'scratch operand']
  #allocation4 [shape = 'f32[8,128]{1,0:T(8,128)}', space=vmem, size = 0x1000, scoped, tag = 'scratch operand']
  %s0 = inlined_call_operand.hbm [shape: f32[2,4,8,256], index: 0, kind: input, shape index: {}]
  %s1 = inlined_call_operand.hbm [shape: f32[2,4,8,256], index: 1, kind: input, shape index: {}]
  %s2 = inlined_call_operand.vmem [shape: f32[1,2,8,1], index: 2, kind: output, shape index: {0}]
  %s3 = inlined_call_operand.vmem [shape: f32[1,2,8,1], index: 3, kind: output, shape index: {1}]
  %s4 = inlined_call_operand.vmem [shape: f32[1,2,8,1], index: 4, kind: output, shape index: {2}]
  %5 = xla_tuple %s2, %s3, %s4
  %s6 = sld [smem:[#allocation0]]
  $region73: #{tpu_custom_call.1} parent=0
    _
  %s8 = ssub.s32 1, %s6
  %s9 = scalar_select 0, %s8, %s6
  $region1: #{tpu_custom_call.1} parent=0
    #allocation5 [shape = 'u8[65536]{0}', space=vmem, size = 0x10000, scoped, tag = 'input window, operand 0']
    #allocation6 [shape = 's32[2]{0}', space=sflag, size = 0x8, scoped, tag = 'scoped memory for tpu_custom_call.1']
    #allocation7 [shape = 'u8[65536]{0}', space=vmem, size = 0x10000, scoped, tag = 'input window, operand 1']
    #allocation8 [shape = 's32[2]{0}', space=sflag, size = 0x8, scoped, tag = 'scoped memory for tpu_custom_call.1']
    %10 = vsyncpa [#allocation6], 0
    %s11 = scalar_lea.sflag [#allocation6], 1
    %12 = vsyncpa %s11, 0
    %13 = vsyncpa [#allocation8], 0
    %s14 = scalar_lea.sflag [#allocation8], 1
    %15 = vsyncpa %s14, 0
    loop: start=0, step=1, limit=4
    $region2: #{tpu_custom_call.1} parent=1 // loop_pre_header
      _
    $region3: #{tpu_custom_call.1} parent=1 // loop_header
      %s17 = sphi 0, %s21
      %p18 = scmp.ge.s32.totalorder %s17, 4
      %s24 = sphi 0, %s50
      %s25 = sphi 0, %s46
      %s26 = sphi 0, %s42
      %s27 = sphi 0, %s38
      %s28 = sphi 0, %s24
      %s29 = sphi 0, %s25
      %s30 = sphi 0, %s26
      %s31 = sphi 0, %s27
      %s32 = sphi 0, %s28
      %s33 = sphi 0, %s29
      %s34 = sphi 0, %s30
      %s35 = sphi 0, %s31
      %s57 = sphi 0, %s59
      %s60 = sphi 0, %s57
      %s61 = sphi 0, %s60
      %s77 = sphi 0, %s61
      %s87 = sphi 0, %s89
      %s90 = sphi 0, %s87
      %s91 = sphi 0, %s90
      %s107 = sphi 0, %s91
      %s115 = sphi 0, %s117
      %s118 = sphi 0, %s115
      %s119 = sphi 0, %s118
      %s135 = sphi 0, %s119
      %s143 = sphi 0, %s145
      %s146 = sphi 0, %s143
      %s147 = sphi 0, %s146
      %s163 = sphi 0, %s147
      %s171 = sphi 0, %s173
      %s174 = sphi 0, %s171
      %s175 = sphi 0, %s174
      %s191 = sphi 0, %s175
    $region4: #{tpu_custom_call.1} parent=1 // loop_header_branch
      %20 = sbr.rel (%p18) target = $region8
    $region5: #{tpu_custom_call.1} parent=1 // loop_body
      %s22 = ssub.s32 %s17, 1
      %s23 = ssub.s32 %s17, 2
      %s36 = sadd.s32 1, %s27
      %p37 = scmp.ge.s32.totalorder %s36, 1
      %s38 = scalar_select %p37, 0, %s36
      %s39 = sadd.s32 1, %s26
      %s40 = scalar_select %p37, %s39, %s26
      %p41 = scmp.ge.s32.totalorder %s40, 1
      %s42 = scalar_select %p41, 0, %s40
      %s43 = sadd.s32 1, %s25
      %s44 = scalar_select %p41, %s43, %s25
      %p45 = scmp.ge.s32.totalorder %s44, 2
      %s46 = scalar_select %p45, 0, %s44
      %s47 = sadd.s32 1, %s24
      %s48 = scalar_select %p45, %s47, %s24
      %p49 = scmp.ge.s32.totalorder %s48, 1
      %s50 = scalar_select %p49, 0, %s48
      %s51 = ssub.s32 %s25, %s46
      %s52 = ssub.s32 %s26, %s42
      %s53 = sor.u32 %s51, %s52
      %s54 = ssub.s32 %s27, %s38
      %s55 = sor.u32 %s53, %s54
      %p56 = scmp.eq.s32.totalorder %s55, 0
      %s58 = sadd.s32 %s57, 1
      %s59 = scalar_select %p56, %s57, %s58
      %p62 = pneg %p56
      %p63 = scmp.eq.s32.totalorder %s17, 1
      %p64 = por %p62, %p63
      %p65 = scmp.ne.s32.totalorder %s57, %s60
      %p66 = scmp.eq.s32.totalorder %s17, 0
      %p67 = por %p65, %p66
      %p68 = scmp.ne.s32.totalorder %s57, %s60
      %p69 = scmp.eq.s32.totalorder %s22, 1
      %p70 = por %p68, %p69
      %p71 = scmp.ne.s32.totalorder %s60, %s61
      %p72 = scmp.eq.s32.totalorder %s22, 0
      %p73 = por %p71, %p72
      %p74 = scmp.ne.s32.totalorder %s60, %s61
      %p75 = scmp.eq.s32.totalorder %s23, 1
      %p76 = por %p74, %p75
      %p78 = scmp.ne.s32.totalorder %s61, %s77
      %p79 = scmp.eq.s32.totalorder %s23, 0
      %p80 = por %p78, %p79
      %s81 = ssub.s32 %s25, %s46
      %s82 = ssub.s32 %s26, %s42
      %s83 = sor.u32 %s81, %s82
      %s84 = ssub.s32 %s27, %s38
      %s85 = sor.u32 %s83, %s84
      %p86 = scmp.eq.s32.totalorder %s85, 0
      %s88 = sadd.s32 %s87, 1
      %s89 = scalar_select %p86, %s87, %s88
      %p92 = pneg %p86
      %p93 = scmp.eq.s32.totalorder %s17, 1
      %p94 = por %p92, %p93
      %p95 = scmp.ne.s32.totalorder %s87, %s90
      %p96 = scmp.eq.s32.totalorder %s17, 0
      %p97 = por %p95, %p96
      %p98 = scmp.ne.s32.totalorder %s87, %s90
      %p99 = scmp.eq.s32.totalorder %s22, 1
      %p100 = por %p98, %p99
      %p101 = scmp.ne.s32.totalorder %s90, %s91
      %p102 = scmp.eq.s32.totalorder %s22, 0
      %p103 = por %p101, %p102
      %p104 = scmp.ne.s32.totalorder %s90, %s91
      %p105 = scmp.eq.s32.totalorder %s23, 1
      %p106 = por %p104, %p105
      %p108 = scmp.ne.s32.totalorder %s91, %s107
      %p109 = scmp.eq.s32.totalorder %s23, 0
      %p110 = por %p108, %p109
      %s111 = ssub.s32 %s24, %s50
      %s112 = ssub.s32 %s25, %s46
      %s113 = sor.u32 %s111, %s112
      %p114 = scmp.eq.s32.totalorder %s113, 0
      %s116 = sadd.s32 %s115, 1
      %s117 = scalar_select %p114, %s115, %s116
      %p120 = pneg %p114
      %p121 = scmp.eq.s32.totalorder %s17, 1
      %p122 = por %p120, %p121
      %p123 = scmp.ne.s32.totalorder %s115, %s118
      %p124 = scmp.eq.s32.totalorder %s17, 0
      %p125 = por %p123, %p124
      %p126 = scmp.ne.s32.totalorder %s115, %s118
      %p127 = scmp.eq.s32.totalorder %s22, 1
      %p128 = por %p126, %p127
      %p129 = scmp.ne.s32.totalorder %s118, %s119
      %p130 = scmp.eq.s32.totalorder %s22, 0
      %p131 = por %p129, %p130
      %p132 = scmp.ne.s32.totalorder %s118, %s119
      %p133 = scmp.eq.s32.totalorder %s23, 1
      %p134 = por %p132, %p133
      %p136 = scmp.ne.s32.totalorder %s119, %s135
      %p137 = scmp.eq.s32.totalorder %s23, 0
      %p138 = por %p136, %p137
      %s139 = ssub.s32 %s24, %s50
      %s140 = ssub.s32 %s25, %s46
      %s141 = sor.u32 %s139, %s140
      %p142 = scmp.eq.s32.totalorder %s141, 0
      %s144 = sadd.s32 %s143, 1
      %s145 = scalar_select %p142, %s143, %s144
      %p148 = pneg %p142
      %p149 = scmp.eq.s32.totalorder %s17, 1
      %p150 = por %p148, %p149
      %p151 = scmp.ne.s32.totalorder %s143, %s146
      %p152 = scmp.eq.s32.totalorder %s17, 0
      %p153 = por %p151, %p152
      %p154 = scmp.ne.s32.totalorder %s143, %s146
      %p155 = scmp.eq.s32.totalorder %s22, 1
      %p156 = por %p154, %p155
      %p157 = scmp.ne.s32.totalorder %s146, %s147
      %p158 = scmp.eq.s32.totalorder %s22, 0
      %p159 = por %p157, %p158
      %p160 = scmp.ne.s32.totalorder %s146, %s147
      %p161 = scmp.eq.s32.totalorder %s23, 1
      %p162 = por %p160, %p161
      %p164 = scmp.ne.s32.totalorder %s147, %s163
      %p165 = scmp.eq.s32.totalorder %s23, 0
      %p166 = por %p164, %p165
      %s167 = ssub.s32 %s24, %s50
      %s168 = ssub.s32 %s25, %s46
      %s169 = sor.u32 %s167, %s168
      %p170 = scmp.eq.s32.totalorder %s169, 0
      %s172 = sadd.s32 %s171, 1
      %s173 = scalar_select %p170, %s171, %s172
      %p176 = pneg %p170
      %p177 = scmp.eq.s32.totalorder %s17, 1
      %p178 = por %p176, %p177
      %p179 = scmp.ne.s32.totalorder %s171, %s174
      %p180 = scmp.eq.s32.totalorder %s17, 0
      %p181 = por %p179, %p180
      %p182 = scmp.ne.s32.totalorder %s171, %s174
      %p183 = scmp.eq.s32.totalorder %s22, 1
      %p184 = por %p182, %p183
      %p185 = scmp.ne.s32.totalorder %s174, %s175
      %p186 = scmp.eq.s32.totalorder %s22, 0
      %p187 = por %p185, %p186
      %p188 = scmp.ne.s32.totalorder %s174, %s175
      %p189 = scmp.eq.s32.totalorder %s23, 1
      %p190 = por %p188, %p189
      %p192 = scmp.ne.s32.totalorder %s175, %s191
      %p193 = scmp.eq.s32.totalorder %s23, 0
      %p194 = por %p192, %p193
      %p195 = scmp.le.s32.totalorder 1, %s17
      %p196 = scmp.lt.s32.totalorder %s17, 3
      %p197 = pnand %p195, %p196
      %p198 = pneg %p197
      // Predicated region
      $region9: #{tpu_custom_call.1} parent=5 // pred_check
        _
      $region10: #{tpu_custom_call.1} parent=5 // pred_check_branch
        %200 = sbr.rel (%p197) target = $region12
      $region11: #{tpu_custom_call.1} parent=5 // pred_region
        %s201 = ssub.s32 %s17, 1
      $region12: #{tpu_custom_call.1} parent=5 // pred_fallthru
        _
      %p202 = scmp.lt.s32.totalorder %s17, 2
      // Predicated region
      $region13: #{tpu_custom_call.1} parent=5 // pred_check
        %p203 = pneg %p202
      $region14: #{tpu_custom_call.1} parent=5 // pred_check_branch
        %205 = sbr.rel (%p203) target = $region16
      $region15: #{tpu_custom_call.1} parent=5 // pred_region
        // Predicated region
        $region17: #{tpu_custom_call.1} parent=15 // pred_check
          %p206 = pneg %p67
        $region18: #{tpu_custom_call.1} parent=15 // pred_check_branch
          %208 = sbr.rel (%p206) target = $region20
        $region19: #{tpu_custom_call.1} parent=15 // pred_region
          %s209 = sand.u32 %s57, 1
          %s210 = scalar_lea.sflag [#allocation6], %s209
          %s211 = sand.u32 %s57, 1
          %s212 = smul.addr %s211, 64
          %s213 = scalar_lea.vmem [#allocation5], %s212
          %s214 = smul.u32 4, %s26
          %s215 = smul.u32 2, %s27
          %217 = vsyncadd %s210, 0
          %s218 = smul.addr %s214, 2
          %s219 = sadd.s32 %s215, %s218
          %s220 = smul.addr %s25, 8
          %s221 = sadd.s32 %s219, %s220
          %s222 = smul.addr %s221, 8
          %s223 = scalar_lea.hbm %s0, %s222
          %s224 = sshll.u32 %s223, 4
          %s225 = int_to_ptr.hbm [resolvable:$true] %s224
          %s226 = sshll.u32 %s213, 4
          %s227 = int_to_ptr.vmem [resolvable:$true] %s226
          %232 = dma.hbm_to_vmem [thread:$0]  %s225, 1024, %s227, %s210, 256, 256, 16
        $region20: #{tpu_custom_call.1} parent=15 // pred_fallthru
          _
        // Predicated region
        $region21: #{tpu_custom_call.1} parent=15 // pred_check
          %p233 = pneg %p97
        $region22: #{tpu_custom_call.1} parent=15 // pred_check_branch
          %235 = sbr.rel (%p233) target = $region24
        $region23: #{tpu_custom_call.1} parent=15 // pred_region
          %s236 = sand.u32 %s87, 1
          %s237 = scalar_lea.sflag [#allocation8], %s236
          %s238 = sand.u32 %s87, 1
          %s239 = smul.addr %s238, 64
          %s240 = scalar_lea.vmem [#allocation7], %s239
          %s241 = smul.u32 4, %s26
          %s242 = smul.u32 2, %s27
          %244 = vsyncadd %s237, 0
          %s245 = smul.addr %s241, 2
          %s246 = sadd.s32 %s242, %s245
          %s247 = smul.addr %s25, 8
          %s248 = sadd.s32 %s246, %s247
          %s249 = smul.addr %s248, 8
          %s250 = scalar_lea.hbm %s1, %s249
          %s251 = sshll.u32 %s250, 4
          %s252 = int_to_ptr.hbm [resolvable:$true] %s251
          %s253 = sshll.u32 %s240, 4
          %s254 = int_to_ptr.vmem [resolvable:$true] %s253
          %259 = dma.hbm_to_vmem [thread:$0]  %s252, 1024, %s254, %s237, 256, 256, 16
        $region24: #{tpu_custom_call.1} parent=15 // pred_fallthru
          _
      $region16: #{tpu_custom_call.1} parent=5 // pred_fallthru
        _
      %p260 = scmp.le.s32.totalorder 1, %s17
      %p261 = scmp.lt.s32.totalorder %s17, 3
      %p262 = pnand %p260, %p261
      %p263 = pneg %p262
      // Predicated region
      $region25: #{tpu_custom_call.1} parent=5 // pred_check
        _
      $region26: #{tpu_custom_call.1} parent=5 // pred_check_branch
        %265 = sbr.rel (%p262) target = $region28
      $region27: #{tpu_custom_call.1} parent=5 // pred_region
        %s266 = ssub.s32 %s17, 1
        %s267 = sand.u32 %s60, 1
        %s268 = scalar_lea.sflag [#allocation6], %s267
        %s269 = sand.u32 %s60, 1
        %s270 = smul.addr %s269, 64
        %s271 = scalar_lea.vmem [#allocation5], %s270
        // Predicated region
        $region29: #{tpu_custom_call.1} parent=27 // pred_check
          %p272 = pneg %p73
        $region30: #{tpu_custom_call.1} parent=27 // pred_check_branch
          %274 = sbr.rel (%p272) target = $region32
        $region31: #{tpu_custom_call.1} parent=27 // pred_region
          %276 = dma.done %s268, 1024
        $region32: #{tpu_custom_call.1} parent=27 // pred_fallthru
          _
        %s277 = sand.u32 %s90, 1
        %s278 = scalar_lea.sflag [#allocation8], %s277
        %s279 = sand.u32 %s90, 1
        %s280 = smul.addr %s279, 64
        %s281 = scalar_lea.vmem [#allocation7], %s280
        // Predicated region
        $region33: #{tpu_custom_call.1} parent=27 // pred_check
          %p282 = pneg %p103
        $region34: #{tpu_custom_call.1} parent=27 // pred_check_branch
          %284 = sbr.rel (%p282) target = $region36
        $region35: #{tpu_custom_call.1} parent=27 // pred_region
          %286 = dma.done %s278, 1024
        $region36: #{tpu_custom_call.1} parent=27 // pred_fallthru
          _
        %s287 = sand.u32 %s60, 1
        %s288 = scalar_lea.sflag [#allocation6], %s287
        %s289 = sand.u32 %s60, 1
        %s290 = smul.addr %s289, 64
        %s291 = scalar_lea.vmem [#allocation5], %s290
        %p292 = pneg %p73
        %p293 = pneg %p70
        %s294 = sand.u32 %s90, 1
        %s295 = scalar_lea.sflag [#allocation8], %s294
        %s296 = sand.u32 %s90, 1
        %s297 = smul.addr %s296, 64
        %s298 = scalar_lea.vmem [#allocation7], %s297
        %p299 = pneg %p103
        %p300 = pneg %p100
        %p301 = pneg %p131
        %p302 = pneg %p128
        %p303 = scmp.lt.s32.totalorder %s28, 0
        %s304 = scalar_select %p303, %s28, 0
        %p305 = scmp.lt.s32.totalorder %s29, 1
        %s306 = scalar_select %p305, %s29, 1
        %s307 = smul.addr %s304, 2
        %s308 = sadd.s32 %s306, %s307
        %s309 = smul.addr %s308, 8
        %s310 = scalar_lea.vmem %s2, %s309
        %p311 = pneg %p159
        %p312 = pneg %p156
        %p313 = scmp.lt.s32.totalorder %s28, 0
        %s314 = scalar_select %p313, %s28, 0
        %p315 = scmp.lt.s32.totalorder %s29, 1
        %s316 = scalar_select %p315, %s29, 1
        %s317 = smul.addr %s314, 2
        %s318 = sadd.s32 %s316, %s317
        %s319 = smul.addr %s318, 8
        %s320 = scalar_lea.vmem %s3, %s319
        %p321 = pneg %p187
        %p322 = pneg %p184
        %p323 = scmp.lt.s32.totalorder %s28, 0
        %s324 = scalar_select %p323, %s28, 0
        %p325 = scmp.lt.s32.totalorder %s29, 1
        %s326 = scalar_select %p325, %s29, 1
        %s327 = smul.addr %s324, 2
        %s328 = sadd.s32 %s326, %s327
        %s329 = smul.addr %s328, 8
        %s330 = scalar_lea.vmem %s4, %s329
        %s331 = smul.u32 4, %s30
        %s332 = smul.u32 2, %s31
        %s333 = smul.u32 4, %s30
        %s334 = smul.u32 2, %s31
        %p335 = scmp.lt.s32.totalorder %s28, 0
        %s336 = scalar_select %p335, %s28, 0
        %p337 = scmp.lt.s32.totalorder %s29, 1
        %s338 = scalar_select %p337, %s29, 1
        %s339 = smul.addr %s336, 2
        %s340 = sadd.s32 %s338, %s339
        %s341 = smul.addr %s340, 8
        %s342 = scalar_lea.vmem %s2, %s341
        %p343 = scmp.lt.s32.totalorder %s28, 0
        %s344 = scalar_select %p343, %s28, 0
        %p345 = scmp.lt.s32.totalorder %s29, 1
        %s346 = scalar_select %p345, %s29, 1
        %s347 = smul.addr %s344, 2
        %s348 = sadd.s32 %s346, %s347
        %s349 = smul.addr %s348, 8
        %s350 = scalar_lea.vmem %s3, %s349
        %p351 = scmp.lt.s32.totalorder %s28, 0
        %s352 = scalar_select %p351, %s28, 0
        %p353 = scmp.lt.s32.totalorder %s29, 1
        %s354 = scalar_select %p353, %s29, 1
        %s355 = smul.addr %s352, 2
        %s356 = sadd.s32 %s354, %s355
        %s357 = smul.addr %s356, 8
        %s358 = scalar_lea.vmem %s4, %s357
        %p359 = scmp.eq.s32.totalorder %s30, 0
        %p360 = scmp.eq.s32.totalorder %s31, 0
        %p361 = pnand %p359, %p360
        %p362 = pneg %p361
        // Predicated region
        $region37: #{tpu_custom_call.1} parent=27 // pred_check
          _
        $region38: #{tpu_custom_call.1} parent=27 // pred_check_branch
          %364 = sbr.rel (%p361) target = $region40
        $region39: #{tpu_custom_call.1} parent=27 // pred_region
          %365 = vst [vmem:[#allocation2] sm:$0xff] 0.0
          %366 = vst [vmem:[#allocation3] sm:$0xff] 0.0
          %367 = vst [vmem:[#allocation4] sm:$0xff] 0.0
        $region40: #{tpu_custom_call.1} parent=27 // pred_fallthru
          _
        %v368 = vld [vmem:[%s271] sm:$0xff]
        %v369 = vld [vmem:[%s271 + $0x8] sm:$0xff]
        %v370 = vld [vmem:[%s271 + $0x10] sm:$0xff]
        %v371 = vld [vmem:[%s271 + $0x18] sm:$0xff]
        %v372 = vld [vmem:[%s271 + $0x20] sm:$0xff]
        %v373 = vld [vmem:[%s271 + $0x28] sm:$0xff]
        %v374 = vld [vmem:[%s271 + $0x30] sm:$0xff]
        %v375 = vld [vmem:[%s271 + $0x38] sm:$0xff]
        %v376 = vld [vmem:[%s281] sm:$0xff]
        %v377 = vld [vmem:[%s281 + $0x8] sm:$0xff]
        %v378 = vld [vmem:[%s281 + $0x10] sm:$0xff]
        %v379 = vld [vmem:[%s281 + $0x18] sm:$0xff]
        %v380 = vld [vmem:[%s281 + $0x20] sm:$0xff]
        %v381 = vld [vmem:[%s281 + $0x28] sm:$0xff]
        %v382 = vld [vmem:[%s281 + $0x30] sm:$0xff]
        %v383 = vld [vmem:[%s281 + $0x38] sm:$0xff]
        %v384 = vmul.f32 %v368, 0.5
        %v385 = vmul.f32 %v369, 0.5
        %v386 = vmul.f32 %v370, 0.5
        %v387 = vmul.f32 %v371, 0.5
        %v388 = vmul.f32 %v372, 0.5
        %v389 = vmul.f32 %v373, 0.5
        %v390 = vmul.f32 %v374, 0.5
        %v391 = vmul.f32 %v375, 0.5
        %v392 = vtanh.pop %v384
        %v393 = vtanh.pop %v385
        %v394 = vtanh.pop %v386
        %v395 = vtanh.pop %v387
        %v396 = vtanh.pop %v388
        %v397 = vtanh.pop %v389
        %v398 = vtanh.pop %v390
        %v399 = vtanh.pop %v391
        %v400 = vmul.f32 %v392, 0.5
        %v401 = vmul.f32 %v393, 0.5
        %v402 = vmul.f32 %v394, 0.5
        %v403 = vmul.f32 %v395, 0.5
        %v404 = vmul.f32 %v396, 0.5
        %v405 = vmul.f32 %v397, 0.5
        %v406 = vmul.f32 %v398, 0.5
        %v407 = vmul.f32 %v399, 0.5
        %v408 = vadd.f32 %v400, 0.5
        %v409 = vadd.f32 %v401, 0.5
        %v410 = vadd.f32 %v402, 0.5
        %v411 = vadd.f32 %v403, 0.5
        %v412 = vadd.f32 %v404, 0.5
        %v413 = vadd.f32 %v405, 0.5
        %v414 = vadd.f32 %v406, 0.5
        %v415 = vadd.f32 %v407, 0.5
        %v416 = vmul.f32 %v408, %v376
        %v417 = vmul.f32 %v409, %v377
        %v418 = vmul.f32 %v410, %v378
        %v419 = vmul.f32 %v411, %v379
        %v420 = vmul.f32 %v412, %v380
        %v421 = vmul.f32 %v413, %v381
        %v422 = vmul.f32 %v414, %v382
        %v423 = vmul.f32 %v415, %v383
        %v424 = vadd.f32 %v416, %v418
        %v425 = vadd.f32 %v424, %v420
        %v426 = vadd.f32 %v425, %v422
        %v427 = vadd.f32 %v417, %v419
        %v428 = vadd.f32 %v427, %v421
        %v429 = vadd.f32 %v428, %v423
        %v430 = vadd.f32 %v408, %v410
        %v431 = vadd.f32 %v430, %v412
        %v432 = vadd.f32 %v431, %v414
        %v433 = vadd.f32 %v409, %v411
        %v434 = vadd.f32 %v433, %v413
        %v435 = vadd.f32 %v434, %v415
        %v436 = vadd.f32 %v376, %v378
        %v437 = vadd.f32 %v436, %v380
        %v438 = vadd.f32 %v437, %v382
        %v439 = vadd.f32 %v377, %v379
        %v440 = vadd.f32 %v439, %v381
        %v441 = vadd.f32 %v440, %v383
        %v442 = vld [vmem:[#allocation2] sm:$0xff]
        %v443 = vadd.f32 %v426, %v429
        %v444 = vadd.f32 %v442, %v443
        %445 = vst [vmem:[#allocation2] sm:$0xff] %v444
        %v446 = vld [vmem:[#allocation3] sm:$0xff]
        %v447 = vadd.f32 %v432, %v435
        %v448 = vadd.f32 %v446, %v447
        %449 = vst [vmem:[#allocation3] sm:$0xff] %v448
        %v450 = vld [vmem:[#allocation4] sm:$0xff]
        %v451 = vadd.f32 %v438, %v441
        %v452 = vadd.f32 %v450, %v451
        %453 = vst [vmem:[#allocation4] sm:$0xff] %v452
        // Predicated region
        $region41: #{tpu_custom_call.1} parent=27 // pred_check
          _
        $region42: #{tpu_custom_call.1} parent=27 // pred_check_branch
          %455 = sbr.rel (%p361) target = $region44
        $region43: #{tpu_custom_call.1} parent=27 // pred_region
          %v456 = vld [vmem:[#allocation2] sm:$0xff]
          %457 = vadd.xlane.f32.xlu0 %v456
          %v458 = vpop.xlane.xlu0 %457
          %vm459 = vcmask 7168
          %460 = vst.msk [vmem:[%s342] sm:$0xff] %vm459, %v458
          %v461 = vld [vmem:[#allocation3] sm:$0xff]
          %462 = vadd.xlane.f32.xlu0 %v461
          %v463 = vpop.xlane.xlu0 %462
          %464 = vst.msk [vmem:[%s350] sm:$0xff] %vm459, %v463
          %v465 = vld [vmem:[#allocation4] sm:$0xff]
          %466 = vadd.xlane.f32.xlu0 %v465
          %v467 = vpop.xlane.xlu0 %466
          %468 = vst.msk [vmem:[%s358] sm:$0xff] %vm459, %v467
        $region44: #{tpu_custom_call.1} parent=27 // pred_fallthru
          _
        %p469 = scmp.lt.s32.totalorder %s28, 0
        %s470 = scalar_select %p469, %s28, 0
        %p471 = scmp.lt.s32.totalorder %s29, 1
        %s472 = scalar_select %p471, %s29, 1
        %s473 = smul.addr %s470, 2
        %s474 = sadd.s32 %s472, %s473
        %s475 = smul.addr %s474, 8
        %s476 = scalar_lea.vmem %s2, %s475
        %p477 = scmp.lt.s32.totalorder %s28, 0
        %s478 = scalar_select %p477, %s28, 0
        %p479 = scmp.lt.s32.totalorder %s29, 1
        %s480 = scalar_select %p479, %s29, 1
        %s481 = smul.addr %s478, 2
        %s482 = sadd.s32 %s480, %s481
        %s483 = smul.addr %s482, 8
        %s484 = scalar_lea.vmem %s3, %s483
        %p485 = scmp.lt.s32.totalorder %s28, 0
        %s486 = scalar_select %p485, %s28, 0
        %p487 = scmp.lt.s32.totalorder %s29, 1
        %s488 = scalar_select %p487, %s29, 1
        %s489 = smul.addr %s486, 2
        %s490 = sadd.s32 %s488, %s489
        %s491 = smul.addr %s490, 8
        %s492 = scalar_lea.vmem %s4, %s491
        // Predicated region
        $region45: #{tpu_custom_call.1} parent=27 // pred_check
          %p493 = pneg %p128
        $region46: #{tpu_custom_call.1} parent=27 // pred_check_branch
          %495 = sbr.rel (%p493) target = $region48
        $region47: #{tpu_custom_call.1} parent=27 // pred_region
          _
        $region48: #{tpu_custom_call.1} parent=27 // pred_fallthru
          _
        // Predicated region
        $region49: #{tpu_custom_call.1} parent=27 // pred_check
          %p496 = pneg %p156
        $region50: #{tpu_custom_call.1} parent=27 // pred_check_branch
          %498 = sbr.rel (%p496) target = $region52
        $region51: #{tpu_custom_call.1} parent=27 // pred_region
          _
        $region52: #{tpu_custom_call.1} parent=27 // pred_fallthru
          _
        // Predicated region
        $region53: #{tpu_custom_call.1} parent=27 // pred_check
          %p499 = pneg %p184
        $region54: #{tpu_custom_call.1} parent=27 // pred_check_branch
          %501 = sbr.rel (%p499) target = $region56
        $region55: #{tpu_custom_call.1} parent=27 // pred_region
          _
        $region56: #{tpu_custom_call.1} parent=27 // pred_fallthru
          _
      $region28: #{tpu_custom_call.1} parent=5 // pred_fallthru
        _
      %p502 = scmp.le.s32.totalorder 2, %s17
      // Predicated region
      $region57: #{tpu_custom_call.1} parent=5 // pred_check
        %p503 = pneg %p502
      $region58: #{tpu_custom_call.1} parent=5 // pred_check_branch
        %505 = sbr.rel (%p503) target = $region60
      $region59: #{tpu_custom_call.1} parent=5 // pred_region
        %s506 = ssub.s32 %s17, 2
        // Predicated region
        $region61: #{tpu_custom_call.1} parent=59 // pred_check
          %p507 = pneg %p134
        $region62: #{tpu_custom_call.1} parent=59 // pred_check_branch
          %509 = sbr.rel (%p507) target = $region64
        $region63: #{tpu_custom_call.1} parent=59 // pred_region
          %p510 = scmp.lt.s32.totalorder %s32, 0
          %s511 = scalar_select %p510, %s32, 0
          %p512 = scmp.lt.s32.totalorder %s33, 1
          %s513 = scalar_select %p512, %s33, 1
          %s514 = smul.addr %s511, 2
          %s515 = sadd.s32 %s513, %s514
          %s516 = smul.addr %s515, 8
          %s517 = scalar_lea.vmem %s2, %s516
        $region64: #{tpu_custom_call.1} parent=59 // pred_fallthru
          _
        // Predicated region
        $region65: #{tpu_custom_call.1} parent=59 // pred_check
          %p518 = pneg %p162
        $region66: #{tpu_custom_call.1} parent=59 // pred_check_branch
          %520 = sbr.rel (%p518) target = $region68
        $region67: #{tpu_custom_call.1} parent=59 // pred_region
          %p521 = scmp.lt.s32.totalorder %s32, 0
          %s522 = scalar_select %p521, %s32, 0
          %p523 = scmp.lt.s32.totalorder %s33, 1
          %s524 = scalar_select %p523, %s33, 1
          %s525 = smul.addr %s522, 2
          %s526 = sadd.s32 %s524, %s525
          %s527 = smul.addr %s526, 8
          %s528 = scalar_lea.vmem %s3, %s527
        $region68: #{tpu_custom_call.1} parent=59 // pred_fallthru
          _
        // Predicated region
        $region69: #{tpu_custom_call.1} parent=59 // pred_check
          %p529 = pneg %p190
        $region70: #{tpu_custom_call.1} parent=59 // pred_check_branch
          %531 = sbr.rel (%p529) target = $region72
        $region71: #{tpu_custom_call.1} parent=59 // pred_region
          %p532 = scmp.lt.s32.totalorder %s32, 0
          %s533 = scalar_select %p532, %s32, 0
          %p534 = scmp.lt.s32.totalorder %s33, 1
          %s535 = scalar_select %p534, %s33, 1
          %s536 = smul.addr %s533, 2
          %s537 = sadd.s32 %s535, %s536
          %s538 = smul.addr %s537, 8
          %s539 = scalar_lea.vmem %s4, %s538
        $region72: #{tpu_custom_call.1} parent=59 // pred_fallthru
          _
      $region60: #{tpu_custom_call.1} parent=5 // pred_fallthru
        _
    $region6: #{tpu_custom_call.1} parent=1 // loop_footer
      %s21 = sadd.s32 1, %s17
    $region7: #{tpu_custom_call.1} parent=1 // loop_footer_branch
      %16 = sbr.rel target = $region3
    $region8: #{tpu_custom_call.1} parent=1 // loop_exit
      _
    %540 = vsyncpa [#allocation6], 1
    %s541 = scalar_lea.sflag [#allocation6], 1
    %542 = vsyncpa %s541, 1
    %543 = vsyncpa [#allocation8], 1
    %s544 = scalar_lea.sflag [#allocation8], 1
    %545 = vsyncpa %s544, 1

</llo_original>
